<compile_context>
chip_gen: v7x
topology: tpu7x:2x2x1
jax: 0.10.0
libtpu: 0.0.40
codegen_flags: <defaults>
</compile_context>

<pallas_src>
import jax
import jax.numpy as jnp
from jax.experimental import pallas as pl
from jax.experimental.pallas import tpu as pltpu


_SMALL_C_MAX = 16                      # <= this -> VPU scalar-broadcast path
_VMEM_BLOCK_BUDGET = 8 * 1024 * 1024   # double-buffered in+out per grid step
                                        # (fits v5e's 16 MiB scoped default)


# ----------------------------------------------------------------------------
# Kernels
# ----------------------------------------------------------------------------
def _torgb_small_c_kernel(w_ref, b_ref, x_ref, o_ref):
    """VPU path for tiny channel counts.

    w_ref: SMEM (out_c, in_c) f32      b_ref: SMEM (out_c,) f32
    x_ref: VMEM (in_c, tS, 128)        o_ref: VMEM (out_c, tS, 128)
    out[o] = tanh(sum_c w[o, c] * x[c] + b[o])
    """
    out_c, in_c = w_ref.shape
    # Hoist all SMEM scalar reads (and their scalar->vreg broadcasts) out of
    # the compute loops; each is read exactly once per kernel invocation.
    w = [[w_ref[o, c] for c in range(in_c)] for o in range(out_c)]
    b = [b_ref[o] for o in range(out_c)]
    for o in range(out_c):
        acc = x_ref[0].astype(jnp.float32) * w[o][0]
        for c in range(1, in_c):
            acc = acc + x_ref[c].astype(jnp.float32) * w[o][c]
        o_ref[o] = jnp.tanh(acc + b[o]).astype(o_ref.dtype)


def _torgb_mxu_kernel(w_ref, b_ref, x_ref, o_ref):
    """MXU path for larger channel counts.

    w_ref: VMEM (8, in_c) f32 (rows >= out_c are zero)
    b_ref: VMEM (8, 1) f32   (rows >= out_c are zero)
    x_ref: VMEM (in_c, tHW)  o_ref: VMEM (out_c, tHW)
    """
    out_c = o_ref.shape[0]
    acc = jnp.dot(w_ref[...], x_ref[...].astype(jnp.float32),
                  preferred_element_type=jnp.float32)          # (8, tHW)
    y = jnp.tanh(acc + b_ref[...])                             # bias broadcast
    o_ref[...] = y[:out_c, :].astype(o_ref.dtype)


# ----------------------------------------------------------------------------
# Spectral normalization (tiny pure-JAX glue op on a (3, C) matrix)
# ----------------------------------------------------------------------------
def _spectral_normalize(weight_mat, u, n_power_iterations=1, eps=1e-12):
    """Forward-time spectral norm of a (out_c, in_c) matrix (1x1 conv weight).

    Matches torch.nn.utils.spectral_norm's training-mode forward with one
    power iteration (F.normalize uses v / max(||v||, eps)).
    """
    # TODO(synk): torch updates the persistent `u` buffer in-place during the
    # training-mode forward; this functional forward does not return it.
    def _l2n(v):
        return v / jnp.maximum(jnp.linalg.norm(v), eps)

    v = None
    for _ in range(n_power_iterations):
        v = _l2n(weight_mat.T @ u)   # (in_c,)
        u = _l2n(weight_mat @ v)     # (out_c,)
    sigma = u @ (weight_mat @ v)
    return weight_mat / sigma


# ----------------------------------------------------------------------------
# Tile-size selection (VMEM-budget & megacore aware)
# ----------------------------------------------------------------------------
def _largest_divisor_multiple(total, cap, step):
    """Largest multiple of `step` that divides `total` and is <= cap, or None."""
    t = (min(total, cap) // step) * step
    while t >= step:
        if total % t == 0:
            return t
        t -= step
    return None


def _pick_sublane_tile(S, in_c, out_c, n_batch):
    bytes_per_row = 2 * (in_c + out_c) * 128 * 4       # double-buffered in+out
    max_ts = max(8, _VMEM_BLOCK_BUDGET // bytes_per_row)
    if n_batch == 1 and S >= 16:
        max_ts = min(max_ts, S // 2)   # >= 2 grid steps so both v7x TCs work
    if S <= max_ts:
        return S
    ts = _largest_divisor_multiple(S, max_ts, 8)
    return ts if ts is not None else S  # fallback: full axis (always legal)


def _pick_lane_tile(HW_pad, in_c, out_c, n_batch):
    bytes_per_lane = 2 * (in_c + out_c) * 4
    max_t = max(128, (_VMEM_BLOCK_BUDGET // bytes_per_lane) // 128 * 128)
    if n_batch == 1 and HW_pad >= 256:
        max_t = min(max_t, max(128, (HW_pad // 2) // 128 * 128))
    if HW_pad <= max_t:
        return HW_pad
    t = _largest_divisor_multiple(HW_pad, max_t, 128)
    return t if t is not None else HW_pad


# ----------------------------------------------------------------------------
# Wrapper
# ----------------------------------------------------------------------------
def torgb_forward(x, weight, bias, u, out_dtype=None):
    """x: (N, C, H, W) -> tanh(spectral_norm(Conv2d(C, 3, 1))(x)), NCHW.

    `out_dtype` may be jnp.bfloat16 to cut the output HBM traffic (~20% of the
    total at small C); accumulation and tanh stay in f32 either way.
    """
    N, C, H, W = x.shape
    out_c = weight.shape[0]   # 3
    HW = H * W
    out_dtype = x.dtype if out_dtype is None else out_dtype

    # Tiny pure-JAX glue: spectrally normalize the 1x1 conv weight.
    w_sn = _spectral_normalize(weight.reshape(out_c, C).astype(jnp.float32),
                               u.astype(jnp.float32))
    b32 = bias.astype(jnp.float32)

    # Free reshape: keep NCHW, flatten spatial dims.  Pad H*W up to a multiple
    # of 128 so every lane of every vreg is valid (no masked stores, no
    # whole-row fallback that could blow v7x's 64 MiB VMEM).
    HW_pad = ((HW + 127) // 128) * 128
    x3 = x.reshape(N, C, HW)
    if HW_pad != HW:
        x3 = jnp.pad(x3, ((0, 0), (0, 0), (0, HW_pad - HW)))

    if C <= _SMALL_C_MAX:
        # ---- VPU scalar-broadcast path (tiny C) ---------------------------
        # Repack H*W onto both sublane AND lane so vregs are fully dense.
        S = HW_pad // 128
        x4 = x3.reshape(N, C, S, 128)
        tS = _pick_sublane_tile(S, C, out_c, N)
        grid = (N, S // tS)
        out4 = pl.pallas_call(
            _torgb_small_c_kernel,
            out_shape=jax.ShapeDtypeStruct((N, out_c, S, 128), out_dtype),
            grid_spec=pltpu.PrefetchScalarGridSpec(
                num_scalar_prefetch=0,
                grid=grid,
                in_specs=[
                    pl.BlockSpec(memory_space=pltpu.MemorySpace.SMEM),  # w
                    pl.BlockSpec(memory_space=pltpu.MemorySpace.SMEM),  # b
                    pl.BlockSpec((None, C, tS, 128),
                                 lambda n, j: (n, 0, j, 0)),
                ],
                out_specs=pl.BlockSpec((None, out_c, tS, 128),
                                       lambda n, j: (n, 0, j, 0)),
            ),
            compiler_params=pltpu.CompilerParams(
                dimension_semantics=("parallel", "parallel")),
        )(w_sn, b32, x4)
        out3 = out4.reshape(N, out_c, HW_pad)
    else:
        # ---- MXU path (large C): channel contraction on the matrix unit ---
        w_pad = jnp.zeros((8, C), jnp.float32).at[:out_c].set(w_sn)
        b_pad = jnp.zeros((8, 1), jnp.float32).at[:out_c, 0].set(b32)
        tHW = _pick_lane_tile(HW_pad, C, out_c, N)
        grid = (N, HW_pad // tHW)
        out3 = pl.pallas_call(
            _torgb_mxu_kernel,
            out_shape=jax.ShapeDtypeStruct((N, out_c, HW_pad), out_dtype),
            grid_spec=pltpu.PrefetchScalarGridSpec(
                num_scalar_prefetch=0,
                grid=grid,
                in_specs=[
                    pl.BlockSpec((8, C), lambda n, j: (0, 0)),   # weight (VMEM)
                    pl.BlockSpec((8, 1), lambda n, j: (0, 0)),   # bias   (VMEM)
                    pl.BlockSpec((None, C, tHW), lambda n, j: (n, 0, j)),
                ],
                out_specs=pl.BlockSpec((None, out_c, tHW),
                                       lambda n, j: (n, 0, j)),
            ),
            compiler_params=pltpu.CompilerParams(
                dimension_semantics=("parallel", "parallel")),
        )(w_pad, b_pad, x3)

    if HW_pad != HW:
        out3 = out3[:, :, :HW]
    return out3.reshape(N, out_c, H, W)


# ----------------------------------------------------------------------------
# Self-test
# ----------------------------------------------------------------------------
if __name__ == "__main__":
    key = jax.random.PRNGKey(0)
    k_x, k_w, k_b, k_u, k_x2, k_w2, k_b2, k_u2 = jax.random.split(key, 8)

    # ---- Small-C (VPU) path -------------------------------------------------
    N, C, H, W = 2, 4, 16, 16
    x = jax.random.normal(k_x, (N, C, H, W), dtype=jnp.float32)
    weight = 0.1 * jax.random.normal(k_w, (3, C, 1, 1), dtype=jnp.float32)
    bias = 0.1 * jax.random.normal(k_b, (3,), dtype=jnp.float32)
    u = jax.random.normal(k_u, (3,), dtype=jnp.float32)
    u = u / jnp.linalg.norm(u)

    out = torgb_forward(x, weight, bias, u)
    jax.block_until_ready(out)

    w_sn = _spectral_normalize(weight.reshape(3, C), u)
    ref = jnp.tanh(jnp.einsum("nchw,oc->nohw", x, w_sn,
                              precision=jax.lax.Precision.HIGHEST)
                   + bias[None, :, None, None])
    assert out.shape == (N, 3, H, W)
    err = float(jnp.max(jnp.abs(out - ref)))
    assert jnp.allclose(out, ref, atol=3e-5, rtol=1e-4), err

    # ---- Large-C (MXU) path smoke check --------------------------------------
    C2 = 32
    x2 = jax.random.normal(k_x2, (N, C2, H, W), dtype=jnp.float32)
    weight2 = 0.05 * jax.random.normal(k_w2, (3, C2, 1, 1), dtype=jnp.float32)
    bias2 = 0.1 * jax.random.normal(k_b2, (3,), dtype=jnp.float32)
    u2 = jax.random.normal(k_u2, (3,), dtype=jnp.float32)
    u2 = u2 / jnp.linalg.norm(u2)

    out2 = torgb_forward(x2, weight2, bias2, u2)
    jax.block_until_ready(out2)

    w_sn2 = _spectral_normalize(weight2.reshape(3, C2), u2)
    ref2 = jnp.tanh(jnp.einsum("nchw,oc->nohw", x2, w_sn2,
                               precision=jax.lax.Precision.HIGHEST)
                    + bias2[None, :, None, None])
    assert out2.shape == (N, 3, H, W)
    err2 = float(jnp.max(jnp.abs(out2 - ref2)))
    assert jnp.allclose(out2, ref2, atol=1e-2, rtol=1e-2), err2

    print("KERNEL_OK")
</pallas_src>

<mosaic_0001>
module attributes {stable_mosaic.version = 11 : i64} {
  func.func @_torgb_small_c_kernel(%arg0: i32, %arg1: i32, %arg2: memref<3x4xf32, #tpu.memory_space<smem>>, %arg3: memref<3xf32, #tpu.memory_space<smem>>, %arg4: memref<1x4x2x128xf32, #tpu.memory_space<vmem>>, %arg5: memref<1x3x2x128xf32, #tpu.memory_space<vmem>>) attributes {dimension_semantics = [#tpu.dimension_semantics<parallel>, #tpu.dimension_semantics<parallel>], iteration_bounds = array<i64: 2, 1>, scalar_prefetch = 0 : i64, scratch_operands = 0 : i64, tpu.core_type = #tpu.core_type<tc>, window_params = [{transform_indices = @transform_0, window_bounds = array<i64: 3, 4>}, {transform_indices = @transform_1, window_bounds = array<i64: 3>}, {transform_indices = @transform_2, window_bounds = array<i64: 1, 4, 2, 128>}, {transform_indices = @transform_3, window_bounds = array<i64: 1, 3, 2, 128>}]} {
    %c0 = arith.constant 0 : index
    %c0_0 = arith.constant 0 : index
    %0 = memref.load %arg2[%c0, %c0_0] : memref<3x4xf32, #tpu.memory_space<smem>>
    %c0_1 = arith.constant 0 : index
    %c1 = arith.constant 1 : index
    %1 = memref.load %arg2[%c0_1, %c1] : memref<3x4xf32, #tpu.memory_space<smem>>
    %c0_2 = arith.constant 0 : index
    %c2 = arith.constant 2 : index
    %2 = memref.load %arg2[%c0_2, %c2] : memref<3x4xf32, #tpu.memory_space<smem>>
    %c0_3 = arith.constant 0 : index
    %c3 = arith.constant 3 : index
    %3 = memref.load %arg2[%c0_3, %c3] : memref<3x4xf32, #tpu.memory_space<smem>>
    %c1_4 = arith.constant 1 : index
    %c0_5 = arith.constant 0 : index
    %4 = memref.load %arg2[%c1_4, %c0_5] : memref<3x4xf32, #tpu.memory_space<smem>>
    %c1_6 = arith.constant 1 : index
    %c1_7 = arith.constant 1 : index
    %5 = memref.load %arg2[%c1_6, %c1_7] : memref<3x4xf32, #tpu.memory_space<smem>>
    %c1_8 = arith.constant 1 : index
    %c2_9 = arith.constant 2 : index
    %6 = memref.load %arg2[%c1_8, %c2_9] : memref<3x4xf32, #tpu.memory_space<smem>>
    %c1_10 = arith.constant 1 : index
    %c3_11 = arith.constant 3 : index
    %7 = memref.load %arg2[%c1_10, %c3_11] : memref<3x4xf32, #tpu.memory_space<smem>>
    %c2_12 = arith.constant 2 : index
    %c0_13 = arith.constant 0 : index
    %8 = memref.load %arg2[%c2_12, %c0_13] : memref<3x4xf32, #tpu.memory_space<smem>>
    %c2_14 = arith.constant 2 : index
    %c1_15 = arith.constant 1 : index
    %9 = memref.load %arg2[%c2_14, %c1_15] : memref<3x4xf32, #tpu.memory_space<smem>>
    %c2_16 = arith.constant 2 : index
    %c2_17 = arith.constant 2 : index
    %10 = memref.load %arg2[%c2_16, %c2_17] : memref<3x4xf32, #tpu.memory_space<smem>>
    %c2_18 = arith.constant 2 : index
    %c3_19 = arith.constant 3 : index
    %11 = memref.load %arg2[%c2_18, %c3_19] : memref<3x4xf32, #tpu.memory_space<smem>>
    %c0_20 = arith.constant 0 : index
    %12 = memref.load %arg3[%c0_20] : memref<3xf32, #tpu.memory_space<smem>>
    %c1_21 = arith.constant 1 : index
    %13 = memref.load %arg3[%c1_21] : memref<3xf32, #tpu.memory_space<smem>>
    %c2_22 = arith.constant 2 : index
    %14 = memref.load %arg3[%c2_22] : memref<3xf32, #tpu.memory_space<smem>>
    %c0_23 = arith.constant 0 : index
    %c0_24 = arith.constant 0 : index
    %c0_25 = arith.constant 0 : index
    %c0_26 = arith.constant 0 : index
    %15 = vector.load %arg4[%c0_23, %c0_24, %c0_25, %c0_26] : memref<1x4x2x128xf32, #tpu.memory_space<vmem>>, vector<1x1x2x128xf32>
    %16 = vector.shape_cast %15 : vector<1x1x2x128xf32> to vector<2x128xf32>
    %17 = vector.broadcast %0 : f32 to vector<2x128xf32>
    %18 = arith.mulf %16, %17 : vector<2x128xf32>
    %c0_27 = arith.constant 0 : index
    %c1_28 = arith.constant 1 : index
    %c0_29 = arith.constant 0 : index
    %c0_30 = arith.constant 0 : index
    %19 = vector.load %arg4[%c0_27, %c1_28, %c0_29, %c0_30] : memref<1x4x2x128xf32, #tpu.memory_space<vmem>>, vector<1x1x2x128xf32>
    %20 = vector.shape_cast %19 : vector<1x1x2x128xf32> to vector<2x128xf32>
    %21 = vector.broadcast %1 : f32 to vector<2x128xf32>
    %22 = arith.mulf %20, %21 : vector<2x128xf32>
    %23 = arith.addf %18, %22 : vector<2x128xf32>
    %c0_31 = arith.constant 0 : index
    %c2_32 = arith.constant 2 : index
    %c0_33 = arith.constant 0 : index
    %c0_34 = arith.constant 0 : index
    %24 = vector.load %arg4[%c0_31, %c2_32, %c0_33, %c0_34] : memref<1x4x2x128xf32, #tpu.memory_space<vmem>>, vector<1x1x2x128xf32>
    %25 = vector.shape_cast %24 : vector<1x1x2x128xf32> to vector<2x128xf32>
    %26 = vector.broadcast %2 : f32 to vector<2x128xf32>
    %27 = arith.mulf %25, %26 : vector<2x128xf32>
    %28 = arith.addf %23, %27 : vector<2x128xf32>
    %c0_35 = arith.constant 0 : index
    %c3_36 = arith.constant 3 : index
    %c0_37 = arith.constant 0 : index
    %c0_38 = arith.constant 0 : index
    %29 = vector.load %arg4[%c0_35, %c3_36, %c0_37, %c0_38] : memref<1x4x2x128xf32, #tpu.memory_space<vmem>>, vector<1x1x2x128xf32>
    %30 = vector.shape_cast %29 : vector<1x1x2x128xf32> to vector<2x128xf32>
    %31 = vector.broadcast %3 : f32 to vector<2x128xf32>
    %32 = arith.mulf %30, %31 : vector<2x128xf32>
    %33 = arith.addf %28, %32 : vector<2x128xf32>
    %34 = vector.broadcast %12 : f32 to vector<2x128xf32>
    %35 = arith.addf %33, %34 : vector<2x128xf32>
    %36 = math.tanh %35 : vector<2x128xf32>
    %c0_39 = arith.constant 0 : index
    %c0_40 = arith.constant 0 : index
    %c0_41 = arith.constant 0 : index
    %c0_42 = arith.constant 0 : index
    %37 = vector.load %arg5[%c0_39, %c0_40, %c0_41, %c0_42] : memref<1x3x2x128xf32, #tpu.memory_space<vmem>>, vector<1x1x2x128xf32>
    %38 = vector.shape_cast %37 : vector<1x1x2x128xf32> to vector<2x128xf32>
    %39 = vector.shape_cast %36 : vector<2x128xf32> to vector<1x1x2x128xf32>
    tpu.vector_store %arg5[%c0_39, %c0_40, %c0_41, %c0_42], %39 {strides = array<i32>} : memref<1x3x2x128xf32, #tpu.memory_space<vmem>>, vector<1x1x2x128xf32>,
    %c0_43 = arith.constant 0 : index
    %c0_44 = arith.constant 0 : index
    %c0_45 = arith.constant 0 : index
    %c0_46 = arith.constant 0 : index
    %40 = vector.load %arg4[%c0_43, %c0_44, %c0_45, %c0_46] : memref<1x4x2x128xf32, #tpu.memory_space<vmem>>, vector<1x1x2x128xf32>
    %41 = vector.shape_cast %40 : vector<1x1x2x128xf32> to vector<2x128xf32>
    %42 = vector.broadcast %4 : f32 to vector<2x128xf32>
    %43 = arith.mulf %41, %42 : vector<2x128xf32>
    %c0_47 = arith.constant 0 : index
    %c1_48 = arith.constant 1 : index
    %c0_49 = arith.constant 0 : index
    %c0_50 = arith.constant 0 : index
    %44 = vector.load %arg4[%c0_47, %c1_48, %c0_49, %c0_50] : memref<1x4x2x128xf32, #tpu.memory_space<vmem>>, vector<1x1x2x128xf32>
    %45 = vector.shape_cast %44 : vector<1x1x2x128xf32> to vector<2x128xf32>
    %46 = vector.broadcast %5 : f32 to vector<2x128xf32>
    %47 = arith.mulf %45, %46 : vector<2x128xf32>
    %48 = arith.addf %43, %47 : vector<2x128xf32>
    %c0_51 = arith.constant 0 : index
    %c2_52 = arith.constant 2 : index
    %c0_53 = arith.constant 0 : index
    %c0_54 = arith.constant 0 : index
    %49 = vector.load %arg4[%c0_51, %c2_52, %c0_53, %c0_54] : memref<1x4x2x128xf32, #tpu.memory_space<vmem>>, vector<1x1x2x128xf32>
    %50 = vector.shape_cast %49 : vector<1x1x2x128xf32> to vector<2x128xf32>
    %51 = vector.broadcast %6 : f32 to vector<2x128xf32>
    %52 = arith.mulf %50, %51 : vector<2x128xf32>
    %53 = arith.addf %48, %52 : vector<2x128xf32>
    %c0_55 = arith.constant 0 : index
    %c3_56 = arith.constant 3 : index
    %c0_57 = arith.constant 0 : index
    %c0_58 = arith.constant 0 : index
    %54 = vector.load %arg4[%c0_55, %c3_56, %c0_57, %c0_58] : memref<1x4x2x128xf32, #tpu.memory_space<vmem>>, vector<1x1x2x128xf32>
    %55 = vector.shape_cast %54 : vector<1x1x2x128xf32> to vector<2x128xf32>
    %56 = vector.broadcast %7 : f32 to vector<2x128xf32>
    %57 = arith.mulf %55, %56 : vector<2x128xf32>
    %58 = arith.addf %53, %57 : vector<2x128xf32>
    %59 = vector.broadcast %13 : f32 to vector<2x128xf32>
    %60 = arith.addf %58, %59 : vector<2x128xf32>
    %61 = math.tanh %60 : vector<2x128xf32>
    %c0_59 = arith.constant 0 : index
    %c1_60 = arith.constant 1 : index
    %c0_61 = arith.constant 0 : index
    %c0_62 = arith.constant 0 : index
    %62 = vector.load %arg5[%c0_59, %c1_60, %c0_61, %c0_62] : memref<1x3x2x128xf32, #tpu.memory_space<vmem>>, vector<1x1x2x128xf32>
    %63 = vector.shape_cast %62 : vector<1x1x2x128xf32> to vector<2x128xf32>
    %64 = vector.shape_cast %61 : vector<2x128xf32> to vector<1x1x2x128xf32>
    tpu.vector_store %arg5[%c0_59, %c1_60, %c0_61, %c0_62], %64 {strides = array<i32>} : memref<1x3x2x128xf32, #tpu.memory_space<vmem>>, vector<1x1x2x128xf32>,
    %c0_63 = arith.constant 0 : index
    %c0_64 = arith.constant 0 : index
    %c0_65 = arith.constant 0 : index
    %c0_66 = arith.constant 0 : index
    %65 = vector.load %arg4[%c0_63, %c0_64, %c0_65, %c0_66] : memref<1x4x2x128xf32, #tpu.memory_space<vmem>>, vector<1x1x2x128xf32>
    %66 = vector.shape_cast %65 : vector<1x1x2x128xf32> to vector<2x128xf32>
    %67 = vector.broadcast %8 : f32 to vector<2x128xf32>
    %68 = arith.mulf %66, %67 : vector<2x128xf32>
    %c0_67 = arith.constant 0 : index
    %c1_68 = arith.constant 1 : index
    %c0_69 = arith.constant 0 : index
    %c0_70 = arith.constant 0 : index
    %69 = vector.load %arg4[%c0_67, %c1_68, %c0_69, %c0_70] : memref<1x4x2x128xf32, #tpu.memory_space<vmem>>, vector<1x1x2x128xf32>
    %70 = vector.shape_cast %69 : vector<1x1x2x128xf32> to vector<2x128xf32>
    %71 = vector.broadcast %9 : f32 to vector<2x128xf32>
    %72 = arith.mulf %70, %71 : vector<2x128xf32>
    %73 = arith.addf %68, %72 : vector<2x128xf32>
    %c0_71 = arith.constant 0 : index
    %c2_72 = arith.constant 2 : index
    %c0_73 = arith.constant 0 : index
    %c0_74 = arith.constant 0 : index
    %74 = vector.load %arg4[%c0_71, %c2_72, %c0_73, %c0_74] : memref<1x4x2x128xf32, #tpu.memory_space<vmem>>, vector<1x1x2x128xf32>
    %75 = vector.shape_cast %74 : vector<1x1x2x128xf32> to vector<2x128xf32>
    %76 = vector.broadcast %10 : f32 to vector<2x128xf32>
    %77 = arith.mulf %75, %76 : vector<2x128xf32>
    %78 = arith.addf %73, %77 : vector<2x128xf32>
    %c0_75 = arith.constant 0 : index
    %c3_76 = arith.constant 3 : index
    %c0_77 = arith.constant 0 : index
    %c0_78 = arith.constant 0 : index
    %79 = vector.load %arg4[%c0_75, %c3_76, %c0_77, %c0_78] : memref<1x4x2x128xf32, #tpu.memory_space<vmem>>, vector<1x1x2x128xf32>
    %80 = vector.shape_cast %79 : vector<1x1x2x128xf32> to vector<2x128xf32>
    %81 = vector.broadcast %11 : f32 to vector<2x128xf32>
    %82 = arith.mulf %80, %81 : vector<2x128xf32>
    %83 = arith.addf %78, %82 : vector<2x128xf32>
    %84 = vector.broadcast %14 : f32 to vector<2x128xf32>
    %85 = arith.addf %83, %84 : vector<2x128xf32>
    %86 = math.tanh %85 : vector<2x128xf32>
    %c0_79 = arith.constant 0 : index
    %c2_80 = arith.constant 2 : index
    %c0_81 = arith.constant 0 : index
    %c0_82 = arith.constant 0 : index
    %87 = vector.load %arg5[%c0_79, %c2_80, %c0_81, %c0_82] : memref<1x3x2x128xf32, #tpu.memory_space<vmem>>, vector<1x1x2x128xf32>
    %88 = vector.shape_cast %87 : vector<1x1x2x128xf32> to vector<2x128xf32>
    %89 = vector.shape_cast %86 : vector<2x128xf32> to vector<1x1x2x128xf32>
    tpu.vector_store %arg5[%c0_79, %c2_80, %c0_81, %c0_82], %89 {strides = array<i32>} : memref<1x3x2x128xf32, #tpu.memory_space<vmem>>, vector<1x1x2x128xf32>,
    return
  }
  func.func @transform_0(%arg0: i32, %arg1: i32) -> (i32, i32) {
    %c0_i32 = arith.constant 0 : i32
    %c0_i32_0 = arith.constant 0 : i32
    %c0_i32_1 = arith.constant 0 : i32
    return %c0_i32, %c0_i32_0 : i32, i32
  }
  func.func @transform_1(%arg0: i32, %arg1: i32) -> i32 {
    %c0_i32 = arith.constant 0 : i32
    %c0_i32_0 = arith.constant 0 : i32
    return %c0_i32 : i32
  }
  func.func @transform_2(%arg0: i32, %arg1: i32) -> (i32, i32, i32, i32) {
    %c0_i32 = arith.constant 0 : i32
    %c0_i32_0 = arith.constant 0 : i32
    %c0_i32_1 = arith.constant 0 : i32
    return %arg0, %c0_i32, %arg1, %c0_i32_0 : i32, i32, i32, i32
  }
  func.func @transform_3(%arg0: i32, %arg1: i32) -> (i32, i32, i32, i32) {
    %c0_i32 = arith.constant 0 : i32
    %c0_i32_0 = arith.constant 0 : i32
    %c0_i32_1 = arith.constant 0 : i32
    return %arg0, %c0_i32, %arg1, %c0_i32_0 : i32, i32, i32, i32
  }
}

</mosaic_0001>

<llo_original>
// kernel: tpu_custom_call.1
$region0: #{tpu_custom_call.1}
  #allocation0 [shape = 'u32[]', space=smem, size = 0x4, offset = 0x4, fixed_abs, tag = 'smem constant byte address 0x4 - core index']
  #allocation1 [shape = 'u32[144,128]{1,0:T(1,128)}', space=vmem, size = 0x12000, scoped, tag = 'internal scratch']
  %s0 = inlined_call_operand.hbm [shape: f32[3,4], index: 0, kind: input, shape index: {}]
  %s1 = inlined_call_operand.vmem [shape: f32[3], index: 1, kind: input, shape index: {}]
  %s2 = inlined_call_operand.hbm [shape: f32[2,4,2,128], index: 2, kind: input, shape index: {}]
  %s3 = inlined_call_operand.hbm [shape: f32[2,3,2,128], index: 3, kind: output, shape index: {}]
  %s4 = sld [smem:[#allocation0]]
  $region57: #{tpu_custom_call.1} parent=0
    _
  %s6 = ssub.s32 1, %s4
  %s7 = scalar_select 0, %s6, %s4
  $region1: #{tpu_custom_call.1} parent=0
    #allocation2 [shape = 'u8[2048]{0}', space=smem, size = 0x800, scoped, tag = 'input window, operand 0, single buffered']
    #allocation3 [shape = 's32[2]{0}', space=sflag, size = 0x8, scoped, tag = 'scoped memory for tpu_custom_call.1']
    #allocation4 [shape = 's32[2]{0}', space=sflag, size = 0x8, scoped, tag = 'scoped memory for tpu_custom_call.1']
    #allocation5 [shape = 's32[2]{0}', space=sflag, size = 0x8, scoped, tag = 'scoped memory for tpu_custom_call.1']
    #allocation6 [shape = 's32[2]{0}', space=sflag, size = 0x8, scoped, tag = 'scoped memory for tpu_custom_call.1']
    #allocation7 [shape = 'u8[512]{0}', space=smem, size = 0x200, scoped, tag = 'input window, operand 1, single buffered']
    #allocation8 [shape = 'u8[8192]{0}', space=vmem, size = 0x2000, scoped, tag = 'input window, operand 2']
    #allocation9 [shape = 'u8[6144]{0}', space=vmem, size = 0x1800, scoped, tag = 'output window, operand 0']
    %8 = vsyncpa [#allocation5], 0
    %9 = vsyncpa [#allocation6], 0
    %10 = vsyncpa [#allocation3], 0
    %s11 = scalar_lea.sflag [#allocation3], 1
    %12 = vsyncpa %s11, 0
    %13 = vsyncpa [#allocation4], 0
    %s14 = scalar_lea.sflag [#allocation4], 1
    %15 = vsyncpa %s14, 0
    loop: start=0, step=1, limit=4
    $region2: #{tpu_custom_call.1} parent=1 // loop_pre_header
      _
    $region3: #{tpu_custom_call.1} parent=1 // loop_header
      %s17 = sphi 0, %s21
      %p18 = scmp.ge.s32.totalorder %s17, 4
      %s24 = sphi 0, %s36
      %s25 = sphi 0, %s32
      %s26 = sphi 0, %s24
      %s27 = sphi 0, %s25
      %s28 = sphi 0, %s26
      %s29 = sphi 0, %s27
      %s37 = sphi 0, %s37
      %s39 = sphi 0, %s37
      %s40 = sphi 0, %s39
      %s54 = sphi 0, %s40
      %s58 = sphi 0, %s58
      %s60 = sphi 0, %s58
      %s61 = sphi 0, %s60
      %s75 = sphi 0, %s61
      %s83 = sphi 0, %s85
      %s86 = sphi 0, %s83
      %s87 = sphi 0, %s86
      %s103 = sphi 0, %s87
      %s111 = sphi 0, %s113
      %s114 = sphi 0, %s111
      %s115 = sphi 0, %s114
      %s131 = sphi 0, %s115
    $region4: #{tpu_custom_call.1} parent=1 // loop_header_branch
      %20 = sbr.rel (%p18) target = $region8
    $region5: #{tpu_custom_call.1} parent=1 // loop_body
      %s22 = ssub.s32 %s17, 1
      %s23 = ssub.s32 %s17, 2
      %s30 = sadd.s32 1, %s25
      %p31 = scmp.ge.s32.totalorder %s30, 1
      %s32 = scalar_select %p31, 0, %s30
      %s33 = sadd.s32 1, %s24
      %s34 = scalar_select %p31, %s33, %s24
      %p35 = scmp.ge.s32.totalorder %s34, 2
      %s36 = scalar_select %p35, 0, %s34
      %s38 = sadd.s32 %s37, 1
      %p41 = scmp.eq.s32.totalorder %s17, 1
      %p42 = scmp.ne.s32.totalorder %s37, %s39
      %p43 = scmp.eq.s32.totalorder %s17, 0
      %p44 = por %p42, %p43
      %p45 = scmp.ne.s32.totalorder %s37, %s39
      %p46 = scmp.eq.s32.totalorder %s22, 1
      %p47 = por %p45, %p46
      %p48 = scmp.ne.s32.totalorder %s39, %s40
      %p49 = scmp.eq.s32.totalorder %s22, 0
      %p50 = por %p48, %p49
      %p51 = scmp.ne.s32.totalorder %s39, %s40
      %p52 = scmp.eq.s32.totalorder %s23, 1
      %p53 = por %p51, %p52
      %p55 = scmp.ne.s32.totalorder %s40, %s54
      %p56 = scmp.eq.s32.totalorder %s23, 0
      %p57 = por %p55, %p56
      %s59 = sadd.s32 %s58, 1
      %p62 = scmp.eq.s32.totalorder %s17, 1
      %p63 = scmp.ne.s32.totalorder %s58, %s60
      %p64 = scmp.eq.s32.totalorder %s17, 0
      %p65 = por %p63, %p64
      %p66 = scmp.ne.s32.totalorder %s58, %s60
      %p67 = scmp.eq.s32.totalorder %s22, 1
      %p68 = por %p66, %p67
      %p69 = scmp.ne.s32.totalorder %s60, %s61
      %p70 = scmp.eq.s32.totalorder %s22, 0
      %p71 = por %p69, %p70
      %p72 = scmp.ne.s32.totalorder %s60, %s61
      %p73 = scmp.eq.s32.totalorder %s23, 1
      %p74 = por %p72, %p73
      %p76 = scmp.ne.s32.totalorder %s61, %s75
      %p77 = scmp.eq.s32.totalorder %s23, 0
      %p78 = por %p76, %p77
      %s79 = ssub.s32 %s24, %s36
      %s80 = ssub.s32 %s25, %s32
      %s81 = sor.u32 %s79, %s80
      %p82 = scmp.eq.s32.totalorder %s81, 0
      %s84 = sadd.s32 %s83, 1
      %s85 = scalar_select %p82, %s83, %s84
      %p88 = pneg %p82
      %p89 = scmp.eq.s32.totalorder %s17, 1
      %p90 = por %p88, %p89
      %p91 = scmp.ne.s32.totalorder %s83, %s86
      %p92 = scmp.eq.s32.totalorder %s17, 0
      %p93 = por %p91, %p92
      %p94 = scmp.ne.s32.totalorder %s83, %s86
      %p95 = scmp.eq.s32.totalorder %s22, 1
      %p96 = por %p94, %p95
      %p97 = scmp.ne.s32.totalorder %s86, %s87
      %p98 = scmp.eq.s32.totalorder %s22, 0
      %p99 = por %p97, %p98
      %p100 = scmp.ne.s32.totalorder %s86, %s87
      %p101 = scmp.eq.s32.totalorder %s23, 1
      %p102 = por %p100, %p101
      %p104 = scmp.ne.s32.totalorder %s87, %s103
      %p105 = scmp.eq.s32.totalorder %s23, 0
      %p106 = por %p104, %p105
      %s107 = ssub.s32 %s24, %s36
      %s108 = ssub.s32 %s25, %s32
      %s109 = sor.u32 %s107, %s108
      %p110 = scmp.eq.s32.totalorder %s109, 0
      %s112 = sadd.s32 %s111, 1
      %s113 = scalar_select %p110, %s111, %s112
      %p116 = pneg %p110
      %p117 = scmp.eq.s32.totalorder %s17, 1
      %p118 = por %p116, %p117
      %p119 = scmp.ne.s32.totalorder %s111, %s114
      %p120 = scmp.eq.s32.totalorder %s17, 0
      %p121 = por %p119, %p120
      %p122 = scmp.ne.s32.totalorder %s111, %s114
      %p123 = scmp.eq.s32.totalorder %s22, 1
      %p124 = por %p122, %p123
      %p125 = scmp.ne.s32.totalorder %s114, %s115
      %p126 = scmp.eq.s32.totalorder %s22, 0
      %p127 = por %p125, %p126
      %p128 = scmp.ne.s32.totalorder %s114, %s115
      %p129 = scmp.eq.s32.totalorder %s23, 1
      %p130 = por %p128, %p129
      %p132 = scmp.ne.s32.totalorder %s115, %s131
      %p133 = scmp.eq.s32.totalorder %s23, 0
      %p134 = por %p132, %p133
      %p135 = scmp.le.s32.totalorder 1, %s17
      %p136 = scmp.lt.s32.totalorder %s17, 3
      %p137 = pnand %p135, %p136
      %p138 = pneg %p137
      // Predicated region
      $region9: #{tpu_custom_call.1} parent=5 // pred_check
        _
      $region10: #{tpu_custom_call.1} parent=5 // pred_check_branch
        %140 = sbr.rel (%p137) target = $region12
      $region11: #{tpu_custom_call.1} parent=5 // pred_region
        %s141 = ssub.s32 %s17, 1
        // Predicated region
        $region13: #{tpu_custom_call.1} parent=11 // pred_check
          %p142 = pneg %p50
        $region14: #{tpu_custom_call.1} parent=11 // pred_check_branch
          %144 = sbr.rel (%p142) target = $region16
        $region15: #{tpu_custom_call.1} parent=11 // pred_region
          %s146 = ssub.s32 64, 64
          %147 = vsyncadd [#allocation5], %s146
          %150 = dma.hbm_to_smem %s0, 64, [#allocation2], [#allocation5]
        $region16: #{tpu_custom_call.1} parent=11 // pred_fallthru
          _
        // Predicated region
        $region17: #{tpu_custom_call.1} parent=11 // pred_check
          %p151 = pneg %p71
        $region18: #{tpu_custom_call.1} parent=11 // pred_check_branch
          %153 = sbr.rel (%p151) target = $region20
        $region19: #{tpu_custom_call.1} parent=11 // pred_region
          %s155 = ssub.s32 16, 16
          %156 = vsyncadd [#allocation6], %s155
          %s158 = sshll.u32 %s1, 4
          %s159 = int_to_ptr.vmem [resolvable:$true] %s158
          %161 = dma.vmem_to_smem %s159, 16, [#allocation7], [#allocation6]
        $region20: #{tpu_custom_call.1} parent=11 // pred_fallthru
          _
      $region12: #{tpu_custom_call.1} parent=5 // pred_fallthru
        _
      %p162 = scmp.lt.s32.totalorder %s17, 2
      // Predicated region
      $region21: #{tpu_custom_call.1} parent=5 // pred_check
        %p163 = pneg %p162
      $region22: #{tpu_custom_call.1} parent=5 // pred_check_branch
        %165 = sbr.rel (%p163) target = $region24
      $region23: #{tpu_custom_call.1} parent=5 // pred_region
        // Predicated region
        $region25: #{tpu_custom_call.1} parent=23 // pred_check
          %p166 = pneg %p93
        $region26: #{tpu_custom_call.1} parent=23 // pred_check_branch
          %168 = sbr.rel (%p166) target = $region28
        $region27: #{tpu_custom_call.1} parent=23 // pred_region
          %s169 = sand.u32 %s83, 1
          %s170 = scalar_lea.sflag [#allocation3], %s169
          %s171 = sand.u32 %s83, 1
          %s172 = smul.addr %s171, 8
          %s173 = scalar_lea.vmem [#allocation8], %s172
          %s175 = ssub.s32 128, 128
          %176 = vsyncadd %s170, %s175
          %s177 = smul.addr %s24, 4
          %s178 = sadd.s32 %s25, %s177
          %s179 = smul.addr %s178, 32
          %s180 = scalar_lea.hbm %s2, %s179
          %s181 = sshll.u32 %s173, 4
          %s182 = int_to_ptr.vmem [resolvable:$true] %s181
          %187 = dma.hbm_to_vmem [thread:$0]  %s180, 128, %s182, %s170, 32, 32, 2
        $region28: #{tpu_custom_call.1} parent=23 // pred_fallthru
          _
      $region24: #{tpu_custom_call.1} parent=5 // pred_fallthru
        _
      %p188 = scmp.le.s32.totalorder 1, %s17
      %p189 = scmp.lt.s32.totalorder %s17, 3
      %p190 = pnand %p188, %p189
      %p191 = pneg %p190
      // Predicated region
      $region29: #{tpu_custom_call.1} parent=5 // pred_check
        _
      $region30: #{tpu_custom_call.1} parent=5 // pred_check_branch
        %193 = sbr.rel (%p190) target = $region32
      $region31: #{tpu_custom_call.1} parent=5 // pred_region
        %s194 = ssub.s32 %s17, 1
        // Predicated region
        $region33: #{tpu_custom_call.1} parent=31 // pred_check
          %p195 = pneg %p50
        $region34: #{tpu_custom_call.1} parent=31 // pred_check_branch
          %197 = sbr.rel (%p195) target = $region36
        $region35: #{tpu_custom_call.1} parent=31 // pred_region
          %198 = dma.done [#allocation5], 64
        $region36: #{tpu_custom_call.1} parent=31 // pred_fallthru
          _
        // Predicated region
        $region37: #{tpu_custom_call.1} parent=31 // pred_check
          %p199 = pneg %p71
        $region38: #{tpu_custom_call.1} parent=31 // pred_check_branch
          %201 = sbr.rel (%p199) target = $region40
        $region39: #{tpu_custom_call.1} parent=31 // pred_region
          %202 = dma.done [#allocation6], 16
        $region40: #{tpu_custom_call.1} parent=31 // pred_fallthru
          _
        %s203 = sand.u32 %s86, 1
        %s204 = scalar_lea.sflag [#allocation3], %s203
        %s205 = sand.u32 %s86, 1
        %s206 = smul.addr %s205, 8
        %s207 = scalar_lea.vmem [#allocation8], %s206
        // Predicated region
        $region41: #{tpu_custom_call.1} parent=31 // pred_check
          %p208 = pneg %p99
        $region42: #{tpu_custom_call.1} parent=31 // pred_check_branch
          %210 = sbr.rel (%p208) target = $region44
        $region43: #{tpu_custom_call.1} parent=31 // pred_region
          %211 = dma.done %s204, 128
        $region44: #{tpu_custom_call.1} parent=31 // pred_fallthru
          _
        %212 = sfence
        %p213 = pneg %p50
        %p214 = pneg %p47
        %p215 = pneg %p71
        %p216 = pneg %p68
        %s217 = sand.u32 %s86, 1
        %s218 = scalar_lea.sflag [#allocation3], %s217
        %s219 = sand.u32 %s86, 1
        %s220 = smul.addr %s219, 8
        %s221 = scalar_lea.vmem [#allocation8], %s220
        %p222 = pneg %p99
        %p223 = pneg %p96
        %p224 = pneg %p127
        %p225 = pneg %p124
        %s226 = sand.u32 %s114, 1
        %s227 = scalar_lea.sflag [#allocation4], %s226
        %s228 = sand.u32 %s114, 1
        %s229 = smul.addr %s228, 6
        %s230 = scalar_lea.vmem [#allocation9], %s229
        %s231 = sld [smem:[#allocation2]]
        %s232 = sld [smem:[#allocation2 + $0x1]]
        %s233 = sld [smem:[#allocation2 + $0x2]]
        %s234 = sld [smem:[#allocation2 + $0x3]]
        %s235 = sld [smem:[#allocation2 + $0x80]]
        %s236 = sld [smem:[#allocation2 + $0x81]]
        %s237 = sld [smem:[#allocation2 + $0x82]]
        %s238 = sld [smem:[#allocation2 + $0x83]]
        %s239 = sld [smem:[#allocation2 + $0x100]]
        %s240 = sld [smem:[#allocation2 + $0x101]]
        %s241 = sld [smem:[#allocation2 + $0x102]]
        %s242 = sld [smem:[#allocation2 + $0x103]]
        %s243 = sld [smem:[#allocation7]]
        %s244 = sld [smem:[#allocation7 + $0x1]]
        %s245 = sld [smem:[#allocation7 + $0x2]]
        %v246 = vld [vmem:[%s207] sm:$0x3]
        %v247 = vstv %s231
        %v248 = vmul.f32 %v246, %v247
        %s249 = scalar_lea.vmem %s207, 2 [#allocation8]
        %v250 = vld [vmem:[%s249] sm:$0x3]
        %v251 = vstv %s232
        %v252 = vmul.f32 %v250, %v251
        %v253 = vadd.f32 %v248, %v252
        %s254 = scalar_lea.vmem %s207, 4 [#allocation8]
        %v255 = vld [vmem:[%s254] sm:$0x3]
        %v256 = vstv %s233
        %v257 = vmul.f32 %v255, %v256
        %v258 = vadd.f32 %v253, %v257
        %s259 = scalar_lea.vmem %s207, 6 [#allocation8]
        %v260 = vld [vmem:[%s259] sm:$0x3]
        %v261 = vstv %s234
        %v262 = vmul.f32 %v260, %v261
        %v263 = vadd.f32 %v258, %v262
        %v264 = vstv %s243
        %v265 = vadd.f32 %v263, %v264
        %v266 = vtanh.pop %v265
        %267 = vst [vmem:[%s230] sm:$0x3] %v266
        %v268 = vld [vmem:[%s207] sm:$0x3]
        %v269 = vstv %s235
        %v270 = vmul.f32 %v268, %v269
        %v271 = vld [vmem:[%s249] sm:$0x3]
        %v272 = vstv %s236
        %v273 = vmul.f32 %v271, %v272
        %v274 = vadd.f32 %v270, %v273
        %v275 = vld [vmem:[%s254] sm:$0x3]
        %v276 = vstv %s237
        %v277 = vmul.f32 %v275, %v276
        %v278 = vadd.f32 %v274, %v277
        %v279 = vld [vmem:[%s259] sm:$0x3]
        %v280 = vstv %s238
        %v281 = vmul.f32 %v279, %v280
        %v282 = vadd.f32 %v278, %v281
        %v283 = vstv %s244
        %v284 = vadd.f32 %v282, %v283
        %v285 = vtanh.pop %v284
        %s286 = scalar_lea.vmem %s230, 2 [#allocation9]
        %287 = vst [vmem:[%s286] sm:$0x3] %v285
        %v288 = vld [vmem:[%s207] sm:$0x3]
        %v289 = vstv %s239
        %v290 = vmul.f32 %v288, %v289
        %v291 = vld [vmem:[%s249] sm:$0x3]
        %v292 = vstv %s240
        %v293 = vmul.f32 %v291, %v292
        %v294 = vadd.f32 %v290, %v293
        %v295 = vld [vmem:[%s254] sm:$0x3]
        %v296 = vstv %s241
        %v297 = vmul.f32 %v295, %v296
        %v298 = vadd.f32 %v294, %v297
        %v299 = vld [vmem:[%s259] sm:$0x3]
        %v300 = vstv %s242
        %v301 = vmul.f32 %v299, %v300
        %v302 = vadd.f32 %v298, %v301
        %v303 = vstv %s245
        %v304 = vadd.f32 %v302, %v303
        %v305 = vtanh.pop %v304
        %s306 = scalar_lea.vmem %s230, 4 [#allocation9]
        %307 = vst [vmem:[%s306] sm:$0x3] %v305
        %s308 = sand.u32 %s114, 1
        %s309 = scalar_lea.sflag [#allocation4], %s308
        %s310 = sand.u32 %s114, 1
        %s311 = smul.addr %s310, 6
        %s312 = scalar_lea.vmem [#allocation9], %s311
        // Predicated region
        $region45: #{tpu_custom_call.1} parent=31 // pred_check
          %p313 = pneg %p124
        $region46: #{tpu_custom_call.1} parent=31 // pred_check_branch
          %315 = sbr.rel (%p313) target = $region48
        $region47: #{tpu_custom_call.1} parent=31 // pred_region
          %s317 = ssub.s32 96, 96
          %318 = vsyncadd %s309, %s317
          %s319 = smul.addr %s26, 3
          %s320 = sadd.s32 %s27, %s319
          %s321 = smul.addr %s320, 32
          %s322 = scalar_lea.hbm %s3, %s321
          %s323 = sshll.u32 %s312, 4
          %s324 = int_to_ptr.vmem [resolvable:$true] %s323
          %329 = dma.vmem_to_hbm [thread:$0]  %s324, 96, %s322, %s309, 32, 32, 2
        $region48: #{tpu_custom_call.1} parent=31 // pred_fallthru
          _
      $region32: #{tpu_custom_call.1} parent=5 // pred_fallthru
        _
      %p330 = scmp.le.s32.totalorder 2, %s17
      // Predicated region
      $region49: #{tpu_custom_call.1} parent=5 // pred_check
        %p331 = pneg %p330
      $region50: #{tpu_custom_call.1} parent=5 // pred_check_branch
        %333 = sbr.rel (%p331) target = $region52
      $region51: #{tpu_custom_call.1} parent=5 // pred_region
        %s334 = ssub.s32 %s17, 2
        // Predicated region
        $region53: #{tpu_custom_call.1} parent=51 // pred_check
          %p335 = pneg %p130
        $region54: #{tpu_custom_call.1} parent=51 // pred_check_branch
          %337 = sbr.rel (%p335) target = $region56
        $region55: #{tpu_custom_call.1} parent=51 // pred_region
          %s338 = sand.u32 %s115, 1
          %s339 = scalar_lea.sflag [#allocation4], %s338
          %s340 = sand.u32 %s115, 1
          %s341 = smul.addr %s340, 6
          %s342 = scalar_lea.vmem [#allocation9], %s341
          %343 = dma.done %s339, 96
        $region56: #{tpu_custom_call.1} parent=51 // pred_fallthru
          _
      $region52: #{tpu_custom_call.1} parent=5 // pred_fallthru
        _
    $region6: #{tpu_custom_call.1} parent=1 // loop_footer
      %s21 = sadd.s32 1, %s17
    $region7: #{tpu_custom_call.1} parent=1 // loop_footer_branch
      %16 = sbr.rel target = $region3
    $region8: #{tpu_custom_call.1} parent=1 // loop_exit
      _
    %344 = vsyncpa [#allocation3], 1
    %s345 = scalar_lea.sflag [#allocation3], 1
    %346 = vsyncpa %s345, 1
    %347 = vsyncpa [#allocation4], 1
    %s348 = scalar_lea.sflag [#allocation4], 1
    %349 = vsyncpa %s348, 1
    %350 = vsyncpa [#allocation5], 1
    %s351 = scalar_lea.sflag [#allocation5], 1
    %352 = vsyncpa %s351, 1
    %353 = vsyncpa [#allocation6], 1
    %s354 = scalar_lea.sflag [#allocation6], 1
    %355 = vsyncpa %s354, 1

</llo_original>
